<compile_context>
chip_gen: v7x
topology: tpu7x:2x2x1
jax: 0.10.0
libtpu: 0.0.40
codegen_flags: <defaults>
</compile_context>

<pallas_src>
import functools
import math

import jax
import jax.numpy as jnp
from jax.experimental import pallas as pl
from jax.experimental.pallas import tpu as pltpu


def _mha_kernel(q_ref, k_ref, v_ref,
                wq_ref, bq_ref, wk_ref, bk_ref,
                wv_ref, bv_ref, wo_ref, bo_ref,
                o_ref, *, n_heads, head_dim, seq_len, batch_per_block):
    f32 = jnp.float32
    bf16 = jnp.bfloat16
    rows = batch_per_block * seq_len          # flattened (batch, seq) rows in this block

    # ---- Q/K/V projections: y = x @ W + b.  W is pre-transposed [H_in, H_out] and
    # already bf16; 1/sqrt(head_dim) is folded into wq/bq.  f32 accumulation.
    xq = q_ref[...].astype(bf16)
    xk = k_ref[...].astype(bf16)
    xv = v_ref[...].astype(bf16)
    Q = jnp.dot(xq, wq_ref[...], preferred_element_type=f32) + bq_ref[...]
    K = jnp.dot(xk, wk_ref[...], preferred_element_type=f32) + bk_ref[...]
    V = jnp.dot(xv, wv_ref[...], preferred_element_type=f32) + bv_ref[...]

    # ---- block-diagonal additive mask: queries attend only to keys of their own
    # batch element (batch is flattened into the row dim).  Built with f32
    # floor(i/S) to avoid vector integer division.
    if batch_per_block > 1:
        ridx = jax.lax.broadcasted_iota(jnp.int32, (rows, rows), 0).astype(f32)
        cidx = jax.lax.broadcasted_iota(jnp.int32, (rows, rows), 1).astype(f32)
        inv_s = f32(1.0 / seq_len)
        row_b = jnp.floor((ridx + f32(0.5)) * inv_s)
        col_b = jnp.floor((cidx + f32(0.5)) * inv_s)
        batch_mask = jnp.where(row_b == col_b, f32(0.0), f32(-1e10))
    else:
        batch_mask = None

    # ---- per-head attention on static 2-D lane slices (no 3-D reshape/einsum).
    ctx_parts = []
    for h in range(n_heads):
        lo = h * head_dim
        hi = lo + head_dim
        Qh = Q[:, lo:hi].astype(bf16)          # (rows, hd)
        Kh = K[:, lo:hi].astype(bf16)          # (rows, hd)
        Vh = V[:, lo:hi].astype(bf16)          # (rows, hd)

        # scores = Qh @ Kh^T   (scale already folded into wq/bq)
        scores = jax.lax.dot_general(
            Qh, Kh, (((1,), (1,)), ((), ())),
            preferred_element_type=f32)        # (rows, rows)
        if batch_mask is not None:
            scores = scores + batch_mask

        # softmax over keys (f32); EUP reciprocal instead of a vector divide.
        m = jnp.max(scores, axis=-1, keepdims=True)
        e = jnp.exp(scores - m)
        s = jnp.sum(e, axis=-1, keepdims=True)
        attn = e * pl.reciprocal(s, approx=False)

        # dropout(attention) is identity in eval mode.
        ctx_parts.append(
            jnp.dot(attn.astype(bf16), Vh, preferred_element_type=f32))

    ctx = jnp.concatenate(ctx_parts, axis=-1).astype(bf16)   # (rows, H)

    # ---- output projection
    out = jnp.dot(ctx, wo_ref[...], preferred_element_type=f32) + bo_ref[...]
    o_ref[...] = out.astype(o_ref.dtype)


def prepare_params(params, n_heads):
    """One-time weight prep (hoisted out of the per-forward path).

    Transposes torch-Linear weights ([out,in] -> [in,out]), casts them to bf16
    for the MXU, folds the 1/sqrt(head_dim) attention scale into wq AND bq, and
    reshapes biases to (1, H) f32 (added after f32 accumulation).
    """
    H = params['wq'].shape[0]
    scale = 1.0 / math.sqrt(H // n_heads)
    return dict(
        wq=(params['wq'].T * scale).astype(jnp.bfloat16),
        bq=(params['bq'] * scale).reshape(1, H).astype(jnp.float32),
        wk=params['wk'].T.astype(jnp.bfloat16),
        bk=params['bk'].reshape(1, H).astype(jnp.float32),
        wv=params['wv'].T.astype(jnp.bfloat16),
        bv=params['bv'].reshape(1, H).astype(jnp.float32),
        wo=params['wo'].T.astype(jnp.bfloat16),
        bo=params['bo'].reshape(1, H).astype(jnp.float32),
    )


def multihead_attention(query, key, value, prepared, *, n_heads, mask=None,
                        num_blocks=1):
    """query/key/value: [B, S, H] float32.  prepared: output of prepare_params().

    num_blocks=1 (default): whole batch in a single kernel invocation — best on
    single-TensorCore chips (v5e/v6e).  num_blocks=2: shards batch halves
    across v7x's two TensorCores via the "parallel" grid axis.
    """
    if mask is not None:
        # TODO(synk): user-supplied attention mask (masked_fill) not implemented.
        raise NotImplementedError("mask != None path is not implemented")

    B, S, H = query.shape
    assert H % n_heads == 0
    assert B % num_blocks == 0
    bpb = B // num_blocks                 # batch elements per grid step
    rows = bpb * S

    q2 = query.reshape(B * S, H)
    k2 = key.reshape(B * S, H)
    v2 = value.reshape(B * S, H)

    act_spec = pl.BlockSpec((rows, H), lambda i: (i, 0))
    w_spec = pl.BlockSpec((H, H), lambda i: (0, 0))
    b_spec = pl.BlockSpec((1, H), lambda i: (0, 0))

    kernel = functools.partial(_mha_kernel, n_heads=n_heads,
                               head_dim=H // n_heads, seq_len=S,
                               batch_per_block=bpb)

    out2 = pl.pallas_call(
        kernel,
        out_shape=jax.ShapeDtypeStruct((B * S, H), jnp.float32),
        grid_spec=pltpu.PrefetchScalarGridSpec(
            num_scalar_prefetch=0,
            grid=(num_blocks,),
            in_specs=[act_spec, act_spec, act_spec,
                      w_spec, b_spec, w_spec, b_spec,
                      w_spec, b_spec, w_spec, b_spec],
            out_specs=act_spec,
        ),
        compiler_params=pltpu.CompilerParams(
            dimension_semantics=("parallel",)),
    )(q2, k2, v2,
      prepared['wq'], prepared['bq'], prepared['wk'], prepared['bk'],
      prepared['wv'], prepared['bv'], prepared['wo'], prepared['bo'])

    return out2.reshape(B, S, H)


def _reference(query, key, value, params, *, n_heads):
    """Plain-JAX f32 reference mirroring the PyTorch forward (mask=None, eval)."""
    B, S, H = query.shape
    hd = H // n_heads

    def lin(x, w, b):
        return x @ w.T + b

    Q = lin(query, params['wq'], params['bq'])
    K = lin(key, params['wk'], params['bk'])
    V = lin(value, params['wv'], params['bv'])
    Q = Q.reshape(B, S, n_heads, hd).transpose(0, 2, 1, 3)
    K = K.reshape(B, S, n_heads, hd).transpose(0, 2, 1, 3)
    V = V.reshape(B, S, n_heads, hd).transpose(0, 2, 1, 3)
    energy = jnp.matmul(Q, K.transpose(0, 1, 3, 2)) / math.sqrt(hd)
    attn = jax.nn.softmax(energy, axis=-1)
    x = jnp.matmul(attn, V)
    x = x.transpose(0, 2, 1, 3).reshape(B, S, H)
    return lin(x, params['wo'], params['bo'])


if __name__ == "__main__":
    B, S, H, n_heads = 2, 8, 32, 4
    key0 = jax.random.PRNGKey(0)
    ks = jax.random.split(key0, 12)

    # Deterministic parameter init (torch Linear-style uniform bound).
    bound = 1.0 / math.sqrt(H)
    params = {
        'wq': jax.random.uniform(ks[0], (H, H), jnp.float32, -bound, bound),
        'bq': jax.random.uniform(ks[1], (H,), jnp.float32, -bound, bound),
        'wk': jax.random.uniform(ks[2], (H, H), jnp.float32, -bound, bound),
        'bk': jax.random.uniform(ks[3], (H,), jnp.float32, -bound, bound),
        'wv': jax.random.uniform(ks[4], (H, H), jnp.float32, -bound, bound),
        'bv': jax.random.uniform(ks[5], (H,), jnp.float32, -bound, bound),
        'wo': jax.random.uniform(ks[6], (H, H), jnp.float32, -bound, bound),
        'bo': jax.random.uniform(ks[7], (H,), jnp.float32, -bound, bound),
    }

    query = jax.random.normal(ks[8], (B, S, H), jnp.float32)
    key_in = jax.random.normal(ks[9], (B, S, H), jnp.float32)
    value = jax.random.normal(ks[10], (B, S, H), jnp.float32)

    prepared = prepare_params(params, n_heads)   # one-time, outside the hot path

    out = multihead_attention(query, key_in, value, prepared, n_heads=n_heads)
    out = jax.block_until_ready(out)

    ref = _reference(query, key_in, value, params, n_heads=n_heads)
    assert out.shape == (B, S, H)
    # bf16 MXU operands (f32 accumulation) -> compare against the pure-f32
    # reference with a correspondingly loosened tolerance.
    assert jnp.allclose(out, ref, atol=3e-2, rtol=3e-2), "mismatch vs reference"
    print("KERNEL_OK")
</pallas_src>

<mosaic_0001>
module attributes {stable_mosaic.version = 11 : i64} {
  func.func @_mha_kernel(%arg0: i32, %arg1: memref<16x32xf32, #tpu.memory_space<vmem>>, %arg2: memref<16x32xf32, #tpu.memory_space<vmem>>, %arg3: memref<16x32xf32, #tpu.memory_space<vmem>>, %arg4: memref<32x32xbf16, #tpu.memory_space<vmem>>, %arg5: memref<1x32xf32, #tpu.memory_space<vmem>>, %arg6: memref<32x32xbf16, #tpu.memory_space<vmem>>, %arg7: memref<1x32xf32, #tpu.memory_space<vmem>>, %arg8: memref<32x32xbf16, #tpu.memory_space<vmem>>, %arg9: memref<1x32xf32, #tpu.memory_space<vmem>>, %arg10: memref<32x32xbf16, #tpu.memory_space<vmem>>, %arg11: memref<1x32xf32, #tpu.memory_space<vmem>>, %arg12: memref<16x32xf32, #tpu.memory_space<vmem>>) attributes {dimension_semantics = [#tpu.dimension_semantics<parallel>], iteration_bounds = array<i64: 1>, scalar_prefetch = 0 : i64, scratch_operands = 0 : i64, tpu.core_type = #tpu.core_type<tc>, window_params = [{transform_indices = @transform_0, window_bounds = array<i64: 16, 32>}, {transform_indices = @transform_1, window_bounds = array<i64: 16, 32>}, {transform_indices = @transform_2, window_bounds = array<i64: 16, 32>}, {pipeline_mode = #tpu.pipeline_mode<synchronous>, transform_indices = @transform_3, window_bounds = array<i64: 32, 32>}, {pipeline_mode = #tpu.pipeline_mode<synchronous>, transform_indices = @transform_4, window_bounds = array<i64: 1, 32>}, {pipeline_mode = #tpu.pipeline_mode<synchronous>, transform_indices = @transform_5, window_bounds = array<i64: 32, 32>}, {pipeline_mode = #tpu.pipeline_mode<synchronous>, transform_indices = @transform_6, window_bounds = array<i64: 1, 32>}, {pipeline_mode = #tpu.pipeline_mode<synchronous>, transform_indices = @transform_7, window_bounds = array<i64: 32, 32>}, {pipeline_mode = #tpu.pipeline_mode<synchronous>, transform_indices = @transform_8, window_bounds = array<i64: 1, 32>}, {pipeline_mode = #tpu.pipeline_mode<synchronous>, transform_indices = @transform_9, window_bounds = array<i64: 32, 32>}, {pipeline_mode = #tpu.pipeline_mode<synchronous>, transform_indices = @transform_10, window_bounds = array<i64: 1, 32>}, {transform_indices = @transform_11, window_bounds = array<i64: 16, 32>}]} {
    %c0 = arith.constant 0 : index
    %c0_0 = arith.constant 0 : index
    %0 = vector.load %arg1[%c0, %c0_0] : memref<16x32xf32, #tpu.memory_space<vmem>>, vector<16x32xf32>
    %1 = arith.truncf %0 : vector<16x32xf32> to vector<16x32xbf16>
    %c0_1 = arith.constant 0 : index
    %c0_2 = arith.constant 0 : index
    %2 = vector.load %arg2[%c0_1, %c0_2] : memref<16x32xf32, #tpu.memory_space<vmem>>, vector<16x32xf32>
    %3 = arith.truncf %2 : vector<16x32xf32> to vector<16x32xbf16>
    %c0_3 = arith.constant 0 : index
    %c0_4 = arith.constant 0 : index
    %4 = vector.load %arg3[%c0_3, %c0_4] : memref<16x32xf32, #tpu.memory_space<vmem>>, vector<16x32xf32>
    %5 = arith.truncf %4 : vector<16x32xf32> to vector<16x32xbf16>
    %c0_5 = arith.constant 0 : index
    %c0_6 = arith.constant 0 : index
    %6 = vector.load %arg4[%c0_5, %c0_6] : memref<32x32xbf16, #tpu.memory_space<vmem>>, vector<32x32xbf16>
    %cst = arith.constant dense<0.000000e+00> : vector<16x32xf32>
    %7 = tpu.matmul %1, %6, %cst {dimension_numbers = #tpu.dot_dimension_numbers<[1], [0], [0], [1], [0, 0, 1, 1], [], []>} : vector<16x32xbf16>, vector<32x32xbf16>, vector<16x32xf32> -> vector<16x32xf32>
    %c0_7 = arith.constant 0 : index
    %c0_8 = arith.constant 0 : index
    %8 = vector.load %arg5[%c0_7, %c0_8] : memref<1x32xf32, #tpu.memory_space<vmem>>, vector<1x32xf32>
    %9 = vector.broadcast %8 : vector<1x32xf32> to vector<16x32xf32>
    %10 = arith.addf %7, %9 : vector<16x32xf32>
    %c0_9 = arith.constant 0 : index
    %c0_10 = arith.constant 0 : index
    %11 = vector.load %arg6[%c0_9, %c0_10] : memref<32x32xbf16, #tpu.memory_space<vmem>>, vector<32x32xbf16>
    %cst_11 = arith.constant dense<0.000000e+00> : vector<16x32xf32>
    %12 = tpu.matmul %3, %11, %cst_11 {dimension_numbers = #tpu.dot_dimension_numbers<[1], [0], [0], [1], [0, 0, 1, 1], [], []>} : vector<16x32xbf16>, vector<32x32xbf16>, vector<16x32xf32> -> vector<16x32xf32>
    %c0_12 = arith.constant 0 : index
    %c0_13 = arith.constant 0 : index
    %13 = vector.load %arg7[%c0_12, %c0_13] : memref<1x32xf32, #tpu.memory_space<vmem>>, vector<1x32xf32>
    %14 = vector.broadcast %13 : vector<1x32xf32> to vector<16x32xf32>
    %15 = arith.addf %12, %14 : vector<16x32xf32>
    %c0_14 = arith.constant 0 : index
    %c0_15 = arith.constant 0 : index
    %16 = vector.load %arg8[%c0_14, %c0_15] : memref<32x32xbf16, #tpu.memory_space<vmem>>, vector<32x32xbf16>
    %cst_16 = arith.constant dense<0.000000e+00> : vector<16x32xf32>
    %17 = tpu.matmul %5, %16, %cst_16 {dimension_numbers = #tpu.dot_dimension_numbers<[1], [0], [0], [1], [0, 0, 1, 1], [], []>} : vector<16x32xbf16>, vector<32x32xbf16>, vector<16x32xf32> -> vector<16x32xf32>
    %c0_17 = arith.constant 0 : index
    %c0_18 = arith.constant 0 : index
    %18 = vector.load %arg9[%c0_17, %c0_18] : memref<1x32xf32, #tpu.memory_space<vmem>>, vector<1x32xf32>
    %19 = vector.broadcast %18 : vector<1x32xf32> to vector<16x32xf32>
    %20 = arith.addf %17, %19 : vector<16x32xf32>
    %21 = tpu.iota {dimensions = array<i32: 0>} : vector<16x16xi32>
    %22 = arith.sitofp %21 : vector<16x16xi32> to vector<16x16xf32>
    %23 = tpu.iota {dimensions = array<i32: 1>} : vector<16x16xi32>
    %24 = arith.sitofp %23 : vector<16x16xi32> to vector<16x16xf32>
    %cst_19 = arith.constant 5.000000e-01 : f32
    %25 = vector.broadcast %cst_19 : f32 to vector<16x16xf32>
    %26 = arith.addf %22, %25 : vector<16x16xf32>
    %cst_20 = arith.constant 1.250000e-01 : f32
    %27 = vector.broadcast %cst_20 : f32 to vector<16x16xf32>
    %28 = arith.mulf %26, %27 : vector<16x16xf32>
    %29 = math.floor %28 : vector<16x16xf32>
    %cst_21 = arith.constant 5.000000e-01 : f32
    %30 = vector.broadcast %cst_21 : f32 to vector<16x16xf32>
    %31 = arith.addf %24, %30 : vector<16x16xf32>
    %cst_22 = arith.constant 1.250000e-01 : f32
    %32 = vector.broadcast %cst_22 : f32 to vector<16x16xf32>
    %33 = arith.mulf %31, %32 : vector<16x16xf32>
    %34 = math.floor %33 : vector<16x16xf32>
    %35 = arith.cmpf oeq, %29, %34 : vector<16x16xf32>
    %cst_23 = arith.constant 0.000000e+00 : f32
    %cst_24 = arith.constant -1.000000e+10 : f32
    %36 = vector.broadcast %cst_23 : f32 to vector<16x16xf32>
    %37 = vector.broadcast %cst_24 : f32 to vector<16x16xf32>
    %38 = arith.select %35, %36, %37 : vector<16x16xi1>, vector<16x16xf32>
    %39 = vector.extract_strided_slice %10 {offsets = [0, 0], sizes = [16, 8], strides = [1, 1]} : vector<16x32xf32> to vector<16x8xf32>
    %40 = arith.truncf %39 : vector<16x8xf32> to vector<16x8xbf16>
    %41 = vector.extract_strided_slice %15 {offsets = [0, 0], sizes = [16, 8], strides = [1, 1]} : vector<16x32xf32> to vector<16x8xf32>
    %42 = arith.truncf %41 : vector<16x8xf32> to vector<16x8xbf16>
    %43 = vector.extract_strided_slice %20 {offsets = [0, 0], sizes = [16, 8], strides = [1, 1]} : vector<16x32xf32> to vector<16x8xf32>
    %44 = arith.truncf %43 : vector<16x8xf32> to vector<16x8xbf16>
    %cst_25 = arith.constant dense<0.000000e+00> : vector<16x16xf32>
    %45 = tpu.matmul %40, %42, %cst_25 {dimension_numbers = #tpu.dot_dimension_numbers<[1], [1], [0], [0], [0, 0, 1, 0], [], []>} : vector<16x8xbf16>, vector<16x8xbf16>, vector<16x16xf32> -> vector<16x16xf32>
    %46 = arith.addf %45, %38 : vector<16x16xf32>
    %cst_26 = arith.constant dense<0xFF800000> : vector<16xf32>
    %47 = vector.multi_reduction <maximumf>, %46, %cst_26 [1] : vector<16x16xf32> to vector<16xf32>
    %48 = vector.shape_cast %47 : vector<16xf32> to vector<16x1xf32>
    %49 = vector.broadcast %48 : vector<16x1xf32> to vector<16x16xf32>
    %50 = arith.subf %46, %49 : vector<16x16xf32>
    %51 = math.exp %50 : vector<16x16xf32>
    %cst_27 = arith.constant dense<0.000000e+00> : vector<16xf32>
    %52 = vector.multi_reduction <add>, %51, %cst_27 [1] : vector<16x16xf32> to vector<16xf32>
    %53 = vector.shape_cast %52 : vector<16xf32> to vector<16x1xf32>
    %54 = tpu.reciprocal %53 : vector<16x1xf32> -> vector<16x1xf32>
    %55 = vector.broadcast %54 : vector<16x1xf32> to vector<16x16xf32>
    %56 = arith.mulf %51, %55 : vector<16x16xf32>
    %57 = arith.truncf %56 : vector<16x16xf32> to vector<16x16xbf16>
    %cst_28 = arith.constant dense<0.000000e+00> : vector<16x8xf32>
    %58 = tpu.matmul %57, %44, %cst_28 {dimension_numbers = #tpu.dot_dimension_numbers<[1], [0], [0], [1], [0, 0, 1, 1], [], []>} : vector<16x16xbf16>, vector<16x8xbf16>, vector<16x8xf32> -> vector<16x8xf32>
    %59 = vector.extract_strided_slice %10 {offsets = [0, 8], sizes = [16, 8], strides = [1, 1]} : vector<16x32xf32> to vector<16x8xf32>
    %60 = arith.truncf %59 : vector<16x8xf32> to vector<16x8xbf16>
    %61 = vector.extract_strided_slice %15 {offsets = [0, 8], sizes = [16, 8], strides = [1, 1]} : vector<16x32xf32> to vector<16x8xf32>
    %62 = arith.truncf %61 : vector<16x8xf32> to vector<16x8xbf16>
    %63 = vector.extract_strided_slice %20 {offsets = [0, 8], sizes = [16, 8], strides = [1, 1]} : vector<16x32xf32> to vector<16x8xf32>
    %64 = arith.truncf %63 : vector<16x8xf32> to vector<16x8xbf16>
    %cst_29 = arith.constant dense<0.000000e+00> : vector<16x16xf32>
    %65 = tpu.matmul %60, %62, %cst_29 {dimension_numbers = #tpu.dot_dimension_numbers<[1], [1], [0], [0], [0, 0, 1, 0], [], []>} : vector<16x8xbf16>, vector<16x8xbf16>, vector<16x16xf32> -> vector<16x16xf32>
    %66 = arith.addf %65, %38 : vector<16x16xf32>
    %cst_30 = arith.constant dense<0xFF800000> : vector<16xf32>
    %67 = vector.multi_reduction <maximumf>, %66, %cst_30 [1] : vector<16x16xf32> to vector<16xf32>
    %68 = vector.shape_cast %67 : vector<16xf32> to vector<16x1xf32>
    %69 = vector.broadcast %68 : vector<16x1xf32> to vector<16x16xf32>
    %70 = arith.subf %66, %69 : vector<16x16xf32>
    %71 = math.exp %70 : vector<16x16xf32>
    %cst_31 = arith.constant dense<0.000000e+00> : vector<16xf32>
    %72 = vector.multi_reduction <add>, %71, %cst_31 [1] : vector<16x16xf32> to vector<16xf32>
    %73 = vector.shape_cast %72 : vector<16xf32> to vector<16x1xf32>
    %74 = tpu.reciprocal %73 : vector<16x1xf32> -> vector<16x1xf32>
    %75 = vector.broadcast %74 : vector<16x1xf32> to vector<16x16xf32>
    %76 = arith.mulf %71, %75 : vector<16x16xf32>
    %77 = arith.truncf %76 : vector<16x16xf32> to vector<16x16xbf16>
    %cst_32 = arith.constant dense<0.000000e+00> : vector<16x8xf32>
    %78 = tpu.matmul %77, %64, %cst_32 {dimension_numbers = #tpu.dot_dimension_numbers<[1], [0], [0], [1], [0, 0, 1, 1], [], []>} : vector<16x16xbf16>, vector<16x8xbf16>, vector<16x8xf32> -> vector<16x8xf32>
    %79 = vector.extract_strided_slice %10 {offsets = [0, 16], sizes = [16, 8], strides = [1, 1]} : vector<16x32xf32> to vector<16x8xf32>
    %80 = arith.truncf %79 : vector<16x8xf32> to vector<16x8xbf16>
    %81 = vector.extract_strided_slice %15 {offsets = [0, 16], sizes = [16, 8], strides = [1, 1]} : vector<16x32xf32> to vector<16x8xf32>
    %82 = arith.truncf %81 : vector<16x8xf32> to vector<16x8xbf16>
    %83 = vector.extract_strided_slice %20 {offsets = [0, 16], sizes = [16, 8], strides = [1, 1]} : vector<16x32xf32> to vector<16x8xf32>
    %84 = arith.truncf %83 : vector<16x8xf32> to vector<16x8xbf16>
    %cst_33 = arith.constant dense<0.000000e+00> : vector<16x16xf32>
    %85 = tpu.matmul %80, %82, %cst_33 {dimension_numbers = #tpu.dot_dimension_numbers<[1], [1], [0], [0], [0, 0, 1, 0], [], []>} : vector<16x8xbf16>, vector<16x8xbf16>, vector<16x16xf32> -> vector<16x16xf32>
    %86 = arith.addf %85, %38 : vector<16x16xf32>
    %cst_34 = arith.constant dense<0xFF800000> : vector<16xf32>
    %87 = vector.multi_reduction <maximumf>, %86, %cst_34 [1] : vector<16x16xf32> to vector<16xf32>
    %88 = vector.shape_cast %87 : vector<16xf32> to vector<16x1xf32>
    %89 = vector.broadcast %88 : vector<16x1xf32> to vector<16x16xf32>
    %90 = arith.subf %86, %89 : vector<16x16xf32>
    %91 = math.exp %90 : vector<16x16xf32>
    %cst_35 = arith.constant dense<0.000000e+00> : vector<16xf32>
    %92 = vector.multi_reduction <add>, %91, %cst_35 [1] : vector<16x16xf32> to vector<16xf32>
    %93 = vector.shape_cast %92 : vector<16xf32> to vector<16x1xf32>
    %94 = tpu.reciprocal %93 : vector<16x1xf32> -> vector<16x1xf32>
    %95 = vector.broadcast %94 : vector<16x1xf32> to vector<16x16xf32>
    %96 = arith.mulf %91, %95 : vector<16x16xf32>
    %97 = arith.truncf %96 : vector<16x16xf32> to vector<16x16xbf16>
    %cst_36 = arith.constant dense<0.000000e+00> : vector<16x8xf32>
    %98 = tpu.matmul %97, %84, %cst_36 {dimension_numbers = #tpu.dot_dimension_numbers<[1], [0], [0], [1], [0, 0, 1, 1], [], []>} : vector<16x16xbf16>, vector<16x8xbf16>, vector<16x8xf32> -> vector<16x8xf32>
    %99 = vector.extract_strided_slice %10 {offsets = [0, 24], sizes = [16, 8], strides = [1, 1]} : vector<16x32xf32> to vector<16x8xf32>
    %100 = arith.truncf %99 : vector<16x8xf32> to vector<16x8xbf16>
    %101 = vector.extract_strided_slice %15 {offsets = [0, 24], sizes = [16, 8], strides = [1, 1]} : vector<16x32xf32> to vector<16x8xf32>
    %102 = arith.truncf %101 : vector<16x8xf32> to vector<16x8xbf16>
    %103 = vector.extract_strided_slice %20 {offsets = [0, 24], sizes = [16, 8], strides = [1, 1]} : vector<16x32xf32> to vector<16x8xf32>
    %104 = arith.truncf %103 : vector<16x8xf32> to vector<16x8xbf16>
    %cst_37 = arith.constant dense<0.000000e+00> : vector<16x16xf32>
    %105 = tpu.matmul %100, %102, %cst_37 {dimension_numbers = #tpu.dot_dimension_numbers<[1], [1], [0], [0], [0, 0, 1, 0], [], []>} : vector<16x8xbf16>, vector<16x8xbf16>, vector<16x16xf32> -> vector<16x16xf32>
    %106 = arith.addf %105, %38 : vector<16x16xf32>
    %cst_38 = arith.constant dense<0xFF800000> : vector<16xf32>
    %107 = vector.multi_reduction <maximumf>, %106, %cst_38 [1] : vector<16x16xf32> to vector<16xf32>
    %108 = vector.shape_cast %107 : vector<16xf32> to vector<16x1xf32>
    %109 = vector.broadcast %108 : vector<16x1xf32> to vector<16x16xf32>
    %110 = arith.subf %106, %109 : vector<16x16xf32>
    %111 = math.exp %110 : vector<16x16xf32>
    %cst_39 = arith.constant dense<0.000000e+00> : vector<16xf32>
    %112 = vector.multi_reduction <add>, %111, %cst_39 [1] : vector<16x16xf32> to vector<16xf32>
    %113 = vector.shape_cast %112 : vector<16xf32> to vector<16x1xf32>
    %114 = tpu.reciprocal %113 : vector<16x1xf32> -> vector<16x1xf32>
    %115 = vector.broadcast %114 : vector<16x1xf32> to vector<16x16xf32>
    %116 = arith.mulf %111, %115 : vector<16x16xf32>
    %117 = arith.truncf %116 : vector<16x16xf32> to vector<16x16xbf16>
    %cst_40 = arith.constant dense<0.000000e+00> : vector<16x8xf32>
    %118 = tpu.matmul %117, %104, %cst_40 {dimension_numbers = #tpu.dot_dimension_numbers<[1], [0], [0], [1], [0, 0, 1, 1], [], []>} : vector<16x16xbf16>, vector<16x8xbf16>, vector<16x8xf32> -> vector<16x8xf32>
    %119 = tpu.concatenate %58, %78, %98, %118 in 1 : vector<16x8xf32>, vector<16x8xf32>, vector<16x8xf32>, vector<16x8xf32> -> vector<16x32xf32>
    %120 = arith.truncf %119 : vector<16x32xf32> to vector<16x32xbf16>
    %c0_41 = arith.constant 0 : index
    %c0_42 = arith.constant 0 : index
    %121 = vector.load %arg10[%c0_41, %c0_42] : memref<32x32xbf16, #tpu.memory_space<vmem>>, vector<32x32xbf16>
    %cst_43 = arith.constant dense<0.000000e+00> : vector<16x32xf32>
    %122 = tpu.matmul %120, %121, %cst_43 {dimension_numbers = #tpu.dot_dimension_numbers<[1], [0], [0], [1], [0, 0, 1, 1], [], []>} : vector<16x32xbf16>, vector<32x32xbf16>, vector<16x32xf32> -> vector<16x32xf32>
    %c0_44 = arith.constant 0 : index
    %c0_45 = arith.constant 0 : index
    %123 = vector.load %arg11[%c0_44, %c0_45] : memref<1x32xf32, #tpu.memory_space<vmem>>, vector<1x32xf32>
    %124 = vector.broadcast %123 : vector<1x32xf32> to vector<16x32xf32>
    %125 = arith.addf %122, %124 : vector<16x32xf32>
    %c0_46 = arith.constant 0 : index
    %c0_47 = arith.constant 0 : index
    %126 = vector.load %arg12[%c0_46, %c0_47] : memref<16x32xf32, #tpu.memory_space<vmem>>, vector<16x32xf32>
    tpu.vector_store %arg12[%c0_46, %c0_47], %125 {strides = array<i32>} : memref<16x32xf32, #tpu.memory_space<vmem>>, vector<16x32xf32>,
    return
  }
  func.func @transform_0(%arg0: i32) -> (i32, i32) {
    %c0_i32 = arith.constant 0 : i32
    %c0_i32_0 = arith.constant 0 : i32
    return %arg0, %c0_i32 : i32, i32
  }
  func.func @transform_1(%arg0: i32) -> (i32, i32) {
    %c0_i32 = arith.constant 0 : i32
    %c0_i32_0 = arith.constant 0 : i32
    return %arg0, %c0_i32 : i32, i32
  }
  func.func @transform_2(%arg0: i32) -> (i32, i32) {
    %c0_i32 = arith.constant 0 : i32
    %c0_i32_0 = arith.constant 0 : i32
    return %arg0, %c0_i32 : i32, i32
  }
  func.func @transform_3(%arg0: i32) -> (i32, i32) {
    %c0_i32 = arith.constant 0 : i32
    %c0_i32_0 = arith.constant 0 : i32
    %c0_i32_1 = arith.constant 0 : i32
    return %c0_i32, %c0_i32_0 : i32, i32
  }
  func.func @transform_4(%arg0: i32) -> (i32, i32) {
    %c0_i32 = arith.constant 0 : i32
    %c0_i32_0 = arith.constant 0 : i32
    %c0_i32_1 = arith.constant 0 : i32
    return %c0_i32, %c0_i32_0 : i32, i32
  }
  func.func @transform_5(%arg0: i32) -> (i32, i32) {
    %c0_i32 = arith.constant 0 : i32
    %c0_i32_0 = arith.constant 0 : i32
    %c0_i32_1 = arith.constant 0 : i32
    return %c0_i32, %c0_i32_0 : i32, i32
  }
  func.func @transform_6(%arg0: i32) -> (i32, i32) {
    %c0_i32 = arith.constant 0 : i32
    %c0_i32_0 = arith.constant 0 : i32
    %c0_i32_1 = arith.constant 0 : i32
    return %c0_i32, %c0_i32_0 : i32, i32
  }
  func.func @transform_7(%arg0: i32) -> (i32, i32) {
    %c0_i32 = arith.constant 0 : i32
    %c0_i32_0 = arith.constant 0 : i32
    %c0_i32_1 = arith.constant 0 : i32
    return %c0_i32, %c0_i32_0 : i32, i32
  }
  func.func @transform_8(%arg0: i32) -> (i32, i32) {
    %c0_i32 = arith.constant 0 : i32
    %c0_i32_0 = arith.constant 0 : i32
    %c0_i32_1 = arith.constant 0 : i32
    return %c0_i32, %c0_i32_0 : i32, i32
  }
  func.func @transform_9(%arg0: i32) -> (i32, i32) {
    %c0_i32 = arith.constant 0 : i32
    %c0_i32_0 = arith.constant 0 : i32
    %c0_i32_1 = arith.constant 0 : i32
    return %c0_i32, %c0_i32_0 : i32, i32
  }
  func.func @transform_10(%arg0: i32) -> (i32, i32) {
    %c0_i32 = arith.constant 0 : i32
    %c0_i32_0 = arith.constant 0 : i32
    %c0_i32_1 = arith.constant 0 : i32
    return %c0_i32, %c0_i32_0 : i32, i32
  }
  func.func @transform_11(%arg0: i32) -> (i32, i32) {
    %c0_i32 = arith.constant 0 : i32
    %c0_i32_0 = arith.constant 0 : i32
    return %arg0, %c0_i32 : i32, i32
  }
}

</mosaic_0001>

<llo_original>
// kernel: tpu_custom_call.1
$region0: #{tpu_custom_call.1}
  #allocation0 [shape = 'u32[]', space=smem, size = 0x4, offset = 0x4, fixed_abs, tag = 'smem constant byte address 0x4 - core index']
  #allocation1 [shape = 'u32[144,128]{1,0:T(1,128)}', space=vmem, size = 0x12000, scoped, tag = 'internal scratch']
  %s0 = inlined_call_operand.hbm [shape: f32[16,32], index: 0, kind: input, shape index: {}]
  %s1 = inlined_call_operand.hbm [shape: f32[16,32], index: 1, kind: input, shape index: {}]
  %s2 = inlined_call_operand.hbm [shape: f32[16,32], index: 2, kind: input, shape index: {}]
  %s3 = inlined_call_operand.hbm [shape: bf16[32,32], index: 3, kind: input, shape index: {}]
  %s4 = inlined_call_operand.vmem [shape: f32[1,32], index: 4, kind: input, shape index: {}]
  %s5 = inlined_call_operand.vmem [shape: bf16[32,32], index: 5, kind: input, shape index: {}]
  %s6 = inlined_call_operand.vmem [shape: f32[1,32], index: 6, kind: input, shape index: {}]
  %s7 = inlined_call_operand.hbm [shape: bf16[32,32], index: 7, kind: input, shape index: {}]
  %s8 = inlined_call_operand.hbm [shape: f32[1,32], index: 8, kind: input, shape index: {}]
  %s9 = inlined_call_operand.vmem [shape: bf16[32,32], index: 9, kind: input, shape index: {}]
  %s10 = inlined_call_operand.vmem [shape: f32[1,32], index: 10, kind: input, shape index: {}]
  %s11 = inlined_call_operand.hbm [shape: f32[16,32], index: 11, kind: output, shape index: {}]
  %s12 = sld [smem:[#allocation0]]
  $region78: #{tpu_custom_call.1} parent=0
    _
  %s14 = ssub.s32 1, %s12
  %s15 = scalar_select 0, %s14, %s12
  $region1: #{tpu_custom_call.1} parent=0
    #allocation2 [shape = 'u8[8192]{0}', space=vmem, size = 0x2000, scoped, tag = 'input window, operand 0, single buffered']
    #allocation3 [shape = 's32[1]{0}', space=sflag, size = 0x4, scoped, tag = 'scoped memory for tpu_custom_call.1']
    #allocation4 [shape = 's32[1]{0}', space=sflag, size = 0x4, scoped, tag = 'scoped memory for tpu_custom_call.1']
    #allocation5 [shape = 'u8[8192]{0}', space=vmem, size = 0x2000, scoped, tag = 'input window, operand 1, single buffered']
    #allocation6 [shape = 's32[1]{0}', space=sflag, size = 0x4, scoped, tag = 'scoped memory for tpu_custom_call.1']
    #allocation7 [shape = 'u8[8192]{0}', space=vmem, size = 0x2000, scoped, tag = 'input window, operand 2, single buffered']
    #allocation8 [shape = 'u8[8192]{0}', space=vmem, size = 0x2000, scoped, tag = 'input window, operand 3, single buffered']
    #allocation9 [shape = 's32[1]{0}', space=sflag, size = 0x4, scoped, tag = 'scoped memory for tpu_custom_call.1']
    #allocation10 [shape = 'u8[8192]{0}', space=vmem, size = 0x2000, scoped, tag = 'input window, operand 7, single buffered']
    #allocation11 [shape = 'u8[512]{0}', space=vmem, size = 0x400, scoped, tag = 'input window, operand 8, single buffered']
    #allocation12 [shape = 's32[1]{0}', space=sflag, size = 0x4, scoped, tag = 'scoped memory for tpu_custom_call.1']
    #allocation13 [shape = 'u8[8192]{0}', space=vmem, size = 0x2000, scoped, tag = 'output window, operand 0, single buffered']
    %16 = vsyncpa [#allocation3], 0
    %17 = vsyncpa [#allocation6], 0
    %18 = vsyncpa [#allocation9], 0
    %19 = vsyncpa [#allocation12], 0
    %20 = vsyncpa [#allocation4], 0
    // Predicated region
    $region2: #{tpu_custom_call.1} parent=1 // pred_check
      _
    $region3: #{tpu_custom_call.1} parent=1 // pred_check_branch
      %22 = sbr.rel (0) target = $region5
    $region4: #{tpu_custom_call.1} parent=1 // pred_region
      %s24 = ssub.s32 256, 256
      %25 = vsyncadd [#allocation3], %s24
      %s26 = sshll.u32 [#allocation2], 4
      %s27 = int_to_ptr.vmem [resolvable:$true] %s26
      %32 = dma.hbm_to_vmem [thread:$0]  %s0, 256, %s27, [#allocation3], 128, 128, 8
    $region5: #{tpu_custom_call.1} parent=1 // pred_fallthru
      _
    // Predicated region
    $region6: #{tpu_custom_call.1} parent=1 // pred_check
      _
    $region7: #{tpu_custom_call.1} parent=1 // pred_check_branch
      %34 = sbr.rel (0) target = $region9
    $region8: #{tpu_custom_call.1} parent=1 // pred_region
      %s36 = ssub.s32 256, 256
      %37 = vsyncadd [#allocation6], %s36
      %s38 = sshll.u32 [#allocation5], 4
      %s39 = int_to_ptr.vmem [resolvable:$true] %s38
      %44 = dma.hbm_to_vmem [thread:$0]  %s1, 256, %s39, [#allocation6], 128, 128, 8
    $region9: #{tpu_custom_call.1} parent=1 // pred_fallthru
      _
    // Predicated region
    $region10: #{tpu_custom_call.1} parent=1 // pred_check
      _
    $region11: #{tpu_custom_call.1} parent=1 // pred_check_branch
      %46 = sbr.rel (0) target = $region13
    $region12: #{tpu_custom_call.1} parent=1 // pred_region
      %s48 = ssub.s32 256, 256
      %49 = vsyncadd [#allocation6], %s48
      %s50 = sshll.u32 [#allocation7], 4
      %s51 = int_to_ptr.vmem [resolvable:$true] %s50
      %56 = dma.hbm_to_vmem [thread:$0]  %s2, 256, %s51, [#allocation6], 128, 128, 8
    $region13: #{tpu_custom_call.1} parent=1 // pred_fallthru
      _
    // Predicated region
    $region14: #{tpu_custom_call.1} parent=1 // pred_check
      _
    $region15: #{tpu_custom_call.1} parent=1 // pred_check_branch
      %58 = sbr.rel (0) target = $region17
    $region16: #{tpu_custom_call.1} parent=1 // pred_region
      %s60 = ssub.s32 256, 256
      %61 = vsyncadd [#allocation9], %s60
      %s62 = sshll.u32 [#allocation8], 4
      %s63 = int_to_ptr.vmem [resolvable:$true] %s62
      %68 = dma.hbm_to_vmem [thread:$0]  %s3, 256, %s63, [#allocation9], 64, 64, 4
    $region17: #{tpu_custom_call.1} parent=1 // pred_fallthru
      _
    // Predicated region
    $region18: #{tpu_custom_call.1} parent=1 // pred_check
      _
    $region19: #{tpu_custom_call.1} parent=1 // pred_check_branch
      %70 = sbr.rel (0) target = $region21
    $region20: #{tpu_custom_call.1} parent=1 // pred_region
      _
    $region21: #{tpu_custom_call.1} parent=1 // pred_fallthru
      _
    // Predicated region
    $region22: #{tpu_custom_call.1} parent=1 // pred_check
      _
    $region23: #{tpu_custom_call.1} parent=1 // pred_check_branch
      %72 = sbr.rel (0) target = $region25
    $region24: #{tpu_custom_call.1} parent=1 // pred_region
      _
    $region25: #{tpu_custom_call.1} parent=1 // pred_fallthru
      _
    // Predicated region
    $region26: #{tpu_custom_call.1} parent=1 // pred_check
      _
    $region27: #{tpu_custom_call.1} parent=1 // pred_check_branch
      %74 = sbr.rel (0) target = $region29
    $region28: #{tpu_custom_call.1} parent=1 // pred_region
      _
    $region29: #{tpu_custom_call.1} parent=1 // pred_fallthru
      _
    // Predicated region
    $region30: #{tpu_custom_call.1} parent=1 // pred_check
      _
    $region31: #{tpu_custom_call.1} parent=1 // pred_check_branch
      %76 = sbr.rel (0) target = $region33
    $region32: #{tpu_custom_call.1} parent=1 // pred_region
      %s78 = ssub.s32 256, 256
      %79 = vsyncadd [#allocation9], %s78
      %s80 = sshll.u32 [#allocation10], 4
      %s81 = int_to_ptr.vmem [resolvable:$true] %s80
      %86 = dma.hbm_to_vmem [thread:$0]  %s7, 256, %s81, [#allocation9], 64, 64, 4
    $region33: #{tpu_custom_call.1} parent=1 // pred_fallthru
      _
    // Predicated region
    $region34: #{tpu_custom_call.1} parent=1 // pred_check
      _
    $region35: #{tpu_custom_call.1} parent=1 // pred_check_branch
      %88 = sbr.rel (0) target = $region37
    $region36: #{tpu_custom_call.1} parent=1 // pred_region
      %s90 = ssub.s32 16, 16
      %91 = vsyncadd [#allocation12], %s90
      %s93 = sshll.u32 [#allocation11], 4
      %s94 = int_to_ptr.vmem [resolvable:$true] %s93
      %96 = dma.hbm_to_vmem [thread:$0]  %s8, 16, %s94, [#allocation12]
    $region37: #{tpu_custom_call.1} parent=1 // pred_fallthru
      _
    // Predicated region
    $region38: #{tpu_custom_call.1} parent=1 // pred_check
      _
    $region39: #{tpu_custom_call.1} parent=1 // pred_check_branch
      %98 = sbr.rel (0) target = $region41
    $region40: #{tpu_custom_call.1} parent=1 // pred_region
      _
    $region41: #{tpu_custom_call.1} parent=1 // pred_fallthru
      _
    // Predicated region
    $region42: #{tpu_custom_call.1} parent=1 // pred_check
      _
    $region43: #{tpu_custom_call.1} parent=1 // pred_check_branch
      %100 = sbr.rel (0) target = $region45
    $region44: #{tpu_custom_call.1} parent=1 // pred_region
      _
    $region45: #{tpu_custom_call.1} parent=1 // pred_fallthru
      _
    // Predicated region
    $region46: #{tpu_custom_call.1} parent=1 // pred_check
      _
    $region47: #{tpu_custom_call.1} parent=1 // pred_check_branch
      %102 = sbr.rel (0) target = $region49
    $region48: #{tpu_custom_call.1} parent=1 // pred_region
      %103 = dma.done [#allocation3], 256
    $region49: #{tpu_custom_call.1} parent=1 // pred_fallthru
      _
    // Predicated region
    $region50: #{tpu_custom_call.1} parent=1 // pred_check
      _
    $region51: #{tpu_custom_call.1} parent=1 // pred_check_branch
      %105 = sbr.rel (0) target = $region53
    $region52: #{tpu_custom_call.1} parent=1 // pred_region
      %106 = dma.done [#allocation6], 256
    $region53: #{tpu_custom_call.1} parent=1 // pred_fallthru
      _
    // Predicated region
    $region54: #{tpu_custom_call.1} parent=1 // pred_check
      _
    $region55: #{tpu_custom_call.1} parent=1 // pred_check_branch
      %108 = sbr.rel (0) target = $region57
    $region56: #{tpu_custom_call.1} parent=1 // pred_region
      %109 = dma.done [#allocation6], 256
    $region57: #{tpu_custom_call.1} parent=1 // pred_fallthru
      _
    // Predicated region
    $region58: #{tpu_custom_call.1} parent=1 // pred_check
      _
    $region59: #{tpu_custom_call.1} parent=1 // pred_check_branch
      %111 = sbr.rel (0) target = $region61
    $region60: #{tpu_custom_call.1} parent=1 // pred_region
      %112 = dma.done [#allocation9], 256
    $region61: #{tpu_custom_call.1} parent=1 // pred_fallthru
      _
    // Predicated region
    $region62: #{tpu_custom_call.1} parent=1 // pred_check
      _
    $region63: #{tpu_custom_call.1} parent=1 // pred_check_branch
      %114 = sbr.rel (0) target = $region65
    $region64: #{tpu_custom_call.1} parent=1 // pred_region
      %115 = dma.done [#allocation9], 256
    $region65: #{tpu_custom_call.1} parent=1 // pred_fallthru
      _
    // Predicated region
    $region66: #{tpu_custom_call.1} parent=1 // pred_check
      _
    $region67: #{tpu_custom_call.1} parent=1 // pred_check_branch
      %117 = sbr.rel (0) target = $region69
    $region68: #{tpu_custom_call.1} parent=1 // pred_region
      %118 = dma.done [#allocation12], 16
    $region69: #{tpu_custom_call.1} parent=1 // pred_fallthru
      _
    %v120 = vld [vmem:[#allocation2] sm:$0xff]
    %v121 = vld [vmem:[#allocation2 + $0x8] sm:$0xff]
    %v122 = vpack.c.bf16 %v121, %v120
    %v123 = vld [vmem:[#allocation5] sm:$0xff]
    %v124 = vld [vmem:[#allocation5 + $0x8] sm:$0xff]
    %v125 = vpack.c.bf16 %v124, %v123
    %v126 = vld [vmem:[#allocation7] sm:$0xff]
    %v127 = vld [vmem:[#allocation7 + $0x8] sm:$0xff]
    %v128 = vpack.c.bf16 %v127, %v126
    %v129 = vld [vmem:[#allocation8] sm:$0xf]
    %v130 = vld [vmem:[#allocation8 + $0x4] sm:$0xf]
    %v131 = vld [vmem:[#allocation8 + $0x8] sm:$0xf]
    %v132 = vld [vmem:[#allocation8 + $0xc] sm:$0xf]
    %v133 = vld [vmem:[%s4] sm:$0x1]
    %v135 = vlaneseq
    %v136 = vshrl.u32 %v135, 7
    %v137 = vsub.s32 0, %v136
    %v138 = vrot.slane %v133, %v137
    %v144 = vunpack.c.l.b16 %v129
    %v145 = vunpack.c.l.b16 %v130
    %v146 = vunpack.c.l.b16 %v131
    %v147 = vunpack.c.l.b16 %v132
    %v148 = vpack.c.b16 %v145, %v144
    %v149 = vpack.c.b16 %v147, %v146
    %vm152 = vcmask 261120
    %v154 = vsel %vm152, %v122, 0
    %156 = vmatprep.subr.bf16.mxu0 0
    %157 = vmatpush1.bf16.msra.mxu0 %v148
    %158 = vmatprep.subr.bf16.mxu0 0
    %159 = vmatpush1.bf16.msra.mxu0 %v149
    %160 = vmatprep.subr.bf16.mxu0 0
    %161 = vmatpush1.bf16.msra.mxu0 0
    %162 = vmatprep.subr.bf16.mxu0 0
    %163 = vmatpush1.bf16.msra.mxu0 0
    %164 = vmatprep.subr.bf16.mxu0 0
    %165 = vmatpush1.bf16.msra.mxu0 0
    %166 = vmatprep.subr.bf16.mxu0 0
    %167 = vmatpush1.bf16.msra.mxu0 0
    %168 = vmatprep.subr.bf16.mxu0 0
    %169 = vmatpush1.bf16.msra.mxu0 0
    %170 = vmatprep.subr.bf16.mxu0 0
    %171 = vmatpush1.bf16.msra.mxu0 0
    %172 = vmatprep.subr.bf16.mxu0 0
    %173 = vmatpush1.bf16.msra.mxu0 0
    %174 = vmatprep.subr.bf16.mxu0 0
    %175 = vmatpush1.bf16.msra.mxu0 0
    %176 = vmatprep.subr.bf16.mxu0 0
    %177 = vmatpush1.bf16.msra.mxu0 0
    %178 = vmatprep.subr.bf16.mxu0 0
    %179 = vmatpush1.bf16.msra.mxu0 0
    %180 = vmatprep.subr.bf16.mxu0 0
    %181 = vmatpush1.bf16.msra.mxu0 0
    %182 = vmatprep.subr.bf16.mxu0 0
    %183 = vmatpush1.bf16.msra.mxu0 0
    %184 = vmatprep.subr.bf16.mxu0 0
    %185 = vmatpush1.bf16.msra.mxu0 0
    %186 = vmatprep.subr.bf16.mxu0 0
    %187 = vmatpush1.bf16.msra.mxu0 0
    %188 = vmatprep.mubr.bf16.mxu0 0
    %189 = vmatmul.mubr.bf16.gmra.mrb[0].mxu0 %v154
    %v190 = vpop.f32.mrb[0].mxu0
    %v191 = vadd.f32 %v138, %v190
    %v192 = vpop.f32.mrb[0].mxu0
    %v193 = vpop.f32.mrb[0].mxu0
    %v194 = vadd.f32 %v138, %v193
    %v195 = vpop.f32.mrb[0].mxu0
    %196 = vdwg.mxu0
    %v197 = vld [vmem:[%s5] sm:$0xf]
    %v198 = vld [vmem:[%s5 + $0x4] sm:$0xf]
    %v199 = vld [vmem:[%s5 + $0x8] sm:$0xf]
    %v200 = vld [vmem:[%s5 + $0xc] sm:$0xf]
    %v201 = vld [vmem:[%s6] sm:$0x1]
    %v203 = vlaneseq
    %v204 = vshrl.u32 %v203, 7
    %v205 = vsub.s32 0, %v204
    %v206 = vrot.slane %v201, %v205
    %v212 = vunpack.c.l.b16 %v197
    %v213 = vunpack.c.l.b16 %v198
    %v214 = vunpack.c.l.b16 %v199
    %v215 = vunpack.c.l.b16 %v200
    %v216 = vpack.c.b16 %v213, %v212
    %v217 = vpack.c.b16 %v215, %v214
    %v221 = vsel %vm152, %v125, 0
    %223 = vmatprep.subr.bf16.mxu0 0
    %224 = vmatpush1.bf16.msra.mxu0 %v216
    %225 = vmatprep.subr.bf16.mxu0 0
    %226 = vmatpush1.bf16.msra.mxu0 %v217
    %227 = vmatprep.subr.bf16.mxu0 0
    %228 = vmatpush1.bf16.msra.mxu0 0
    %229 = vmatprep.subr.bf16.mxu0 0
    %230 = vmatpush1.bf16.msra.mxu0 0
    %231 = vmatprep.subr.bf16.mxu0 0
    %232 = vmatpush1.bf16.msra.mxu0 0
    %233 = vmatprep.subr.bf16.mxu0 0
    %234 = vmatpush1.bf16.msra.mxu0 0
    %235 = vmatprep.subr.bf16.mxu0 0
    %236 = vmatpush1.bf16.msra.mxu0 0
    %237 = vmatprep.subr.bf16.mxu0 0
    %238 = vmatpush1.bf16.msra.mxu0 0
    %239 = vmatprep.subr.bf16.mxu0 0
    %240 = vmatpush1.bf16.msra.mxu0 0
    %241 = vmatprep.subr.bf16.mxu0 0
    %242 = vmatpush1.bf16.msra.mxu0 0
    %243 = vmatprep.subr.bf16.mxu0 0
    %244 = vmatpush1.bf16.msra.mxu0 0
    %245 = vmatprep.subr.bf16.mxu0 0
    %246 = vmatpush1.bf16.msra.mxu0 0
    %247 = vmatprep.subr.bf16.mxu0 0
    %248 = vmatpush1.bf16.msra.mxu0 0
    %249 = vmatprep.subr.bf16.mxu0 0
    %250 = vmatpush1.bf16.msra.mxu0 0
    %251 = vmatprep.subr.bf16.mxu0 0
    %252 = vmatpush1.bf16.msra.mxu0 0
    %253 = vmatprep.subr.bf16.mxu0 0
    %254 = vmatpush1.bf16.msra.mxu0 0
    %255 = vmatprep.mubr.bf16.mxu0 0
    %256 = vmatmul.mubr.bf16.gmra.mrb[0].mxu0 %v221
    %v257 = vpop.f32.mrb[0].mxu0
    %v258 = vadd.f32 %v206, %v257
    %v259 = vpop.f32.mrb[0].mxu0
    %v260 = vpop.f32.mrb[0].mxu0
    %v261 = vadd.f32 %v206, %v260
    %v262 = vpop.f32.mrb[0].mxu0
    %263 = vdwg.mxu0
    %v264 = vld [vmem:[#allocation10] sm:$0xf]
    %v265 = vld [vmem:[#allocation10 + $0x4] sm:$0xf]
    %v266 = vld [vmem:[#allocation10 + $0x8] sm:$0xf]
    %v267 = vld [vmem:[#allocation10 + $0xc] sm:$0xf]
    %v268 = vld [vmem:[#allocation11] sm:$0x1]
    %v270 = vlaneseq
    %v271 = vshrl.u32 %v270, 7
    %v272 = vsub.s32 0, %v271
    %v273 = vrot.slane %v268, %v272
    %v279 = vunpack.c.l.b16 %v264
    %v280 = vunpack.c.l.b16 %v265
    %v281 = vunpack.c.l.b16 %v266
    %v282 = vunpack.c.l.b16 %v267
    %v283 = vpack.c.b16 %v280, %v279
    %v284 = vpack.c.b16 %v282, %v281
    %v288 = vsel %vm152, %v128, 0
    %290 = vmatprep.subr.bf16.mxu0 0
    %291 = vmatpush1.bf16.msra.mxu0 %v283
    %292 = vmatprep.subr.bf16.mxu0 0
    %293 = vmatpush1.bf16.msra.mxu0 %v284
    %294 = vmatprep.subr.bf16.mxu0 0
    %295 = vmatpush1.bf16.msra.mxu0 0
    %296 = vmatprep.subr.bf16.mxu0 0
    %297 = vmatpush1.bf16.msra.mxu0 0
    %298 = vmatprep.subr.bf16.mxu0 0
    %299 = vmatpush1.bf16.msra.mxu0 0
    %300 = vmatprep.subr.bf16.mxu0 0
    %301 = vmatpush1.bf16.msra.mxu0 0
    %302 = vmatprep.subr.bf16.mxu0 0
    %303 = vmatpush1.bf16.msra.mxu0 0
    %304 = vmatprep.subr.bf16.mxu0 0
    %305 = vmatpush1.bf16.msra.mxu0 0
    %306 = vmatprep.subr.bf16.mxu0 0
    %307 = vmatpush1.bf16.msra.mxu0 0
    %308 = vmatprep.subr.bf16.mxu0 0
    %309 = vmatpush1.bf16.msra.mxu0 0
    %310 = vmatprep.subr.bf16.mxu0 0
    %311 = vmatpush1.bf16.msra.mxu0 0
    %312 = vmatprep.subr.bf16.mxu0 0
    %313 = vmatpush1.bf16.msra.mxu0 0
    %314 = vmatprep.subr.bf16.mxu0 0
    %315 = vmatpush1.bf16.msra.mxu0 0
    %316 = vmatprep.subr.bf16.mxu0 0
    %317 = vmatpush1.bf16.msra.mxu0 0
    %318 = vmatprep.subr.bf16.mxu0 0
    %319 = vmatpush1.bf16.msra.mxu0 0
    %320 = vmatprep.subr.bf16.mxu0 0
    %321 = vmatpush1.bf16.msra.mxu0 0
    %322 = vmatprep.mubr.bf16.mxu0 0
    %323 = vmatmul.mubr.bf16.gmra.mrb[0].mxu0 %v288
    %v324 = vpop.f32.mrb[0].mxu0
    %v325 = vadd.f32 %v273, %v324
    %v326 = vpop.f32.mrb[0].mxu0
    %v327 = vpop.f32.mrb[0].mxu0
    %v328 = vadd.f32 %v273, %v327
    %v329 = vpop.f32.mrb[0].mxu0
    %330 = vdwg.mxu0
    %v331 = vlaneseq
    %v332 = vshrl.u32 %v331, 7
    %v333 = vadd.s32 %v332, 8
    %v334 = vcvt.s32.f32 %v332
    %v335 = vcvt.s32.f32 %v333
    %v336 = vlaneseq
    %v337 = vand.u32 %v336, 127
    %v338 = vcvt.s32.f32 %v337
    %v339 = vadd.f32 %v334, 0.5
    %v340 = vadd.f32 %v335, 0.5
    %v341 = vmul.f32 %v339, 0.125
    %v342 = vmul.f32 %v340, 0.125
    %v343 = vfloor.f32 %v341
    %v344 = vfloor.f32 %v342
    %v345 = vadd.f32 %v338, 0.5
    %v346 = vmul.f32 %v345, 0.125
    %v347 = vfloor.f32 %v346
    %vm348 = vcmp.eq.f32.partialorder %v343, %v347
    %vm349 = vcmp.eq.f32.partialorder %v344, %v347
    %v350 = vsel %vm348, 0.0, -1e+10
    %v351 = vsel %vm349, 0.0, -1e+10
    %v352 = vpack.c.bf16 %v194, %v191
    %v353 = vpack.c.bf16 %v261, %v258
    %v354 = vpack.c.bf16 %v328, %v325
    %vm355 = vcmask 64512
    %v357 = vsel %vm355, %v352, 0
    %v360 = vsel %vm355, %v353, 0
    %362 = vmatprep.subr.bf16.mxu0 0
    %363 = vmatpush1.bf16.xpose.msra.mxu0 %v360
    %364 = vmatprep.subr.bf16.mxu0 0
    %365 = vmatpush1.bf16.xpose.msra.mxu0 0
    %366 = vmatprep.subr.bf16.mxu0 0
    %367 = vmatpush1.bf16.xpose.msra.mxu0 0
    %368 = vmatprep.subr.bf16.mxu0 0
    %369 = vmatpush1.bf16.xpose.msra.mxu0 0
    %370 = vmatprep.subr.bf16.mxu0 0
    %371 = vmatpush1.bf16.xpose.msra.mxu0 0
    %372 = vmatprep.subr.bf16.mxu0 0
    %373 = vmatpush1.bf16.xpose.msra.mxu0 0
    %374 = vmatprep.subr.bf16.mxu0 0
    %375 = vmatpush1.bf16.xpose.msra.mxu0 0
    %376 = vmatprep.subr.bf16.mxu0 0
    %377 = vmatpush1.bf16.xpose.msra.mxu0 0
    %378 = vmatprep.subr.bf16.mxu0 0
    %379 = vmatpush1.bf16.xpose.msra.mxu0 0
    %380 = vmatprep.subr.bf16.mxu0 0
    %381 = vmatpush1.bf16.xpose.msra.mxu0 0
    %382 = vmatprep.subr.bf16.mxu0 0
    %383 = vmatpush1.bf16.xpose.msra.mxu0 0
    %384 = vmatprep.subr.bf16.mxu0 0
    %385 = vmatpush1.bf16.xpose.msra.mxu0 0
    %386 = vmatprep.subr.bf16.mxu0 0
    %387 = vmatpush1.bf16.xpose.msra.mxu0 0
    %388 = vmatprep.subr.bf16.mxu0 0
    %389 = vmatpush1.bf16.xpose.msra.mxu0 0
    %390 = vmatprep.subr.bf16.mxu0 0
    %391 = vmatpush1.bf16.xpose.msra.mxu0 0
    %392 = vmatprep.subr.bf16.mxu0 0
    %393 = vmatpush1.bf16.xpose.msra.mxu0 0
    %394 = vmatprep.mubr.bf16.mxu0 0
    %395 = vmatmul.mubr.bf16.gmra.mrb[0].mxu0 %v357
    %v396 = vpop.f32.mrb[0].mxu0
    %v397 = vadd.f32 %v350, %v396
    %v398 = vpop.f32.mrb[0].mxu0
    %v399 = vpop.f32.mrb[0].mxu0
    %v400 = vadd.f32 %v351, %v399
    %v401 = vpop.f32.mrb[0].mxu0
    %402 = vdwg.mxu0
    %vm403 = vcmask 130048
    %v404 = vsel %vm403, %v397, -inf
    %405 = vmax.xlane.f32.xlu0 %v404
    %v406 = vpop.xlane.xlu0 %405
    %v407 = vsel %vm403, %v400, -inf
    %408 = vmax.xlane.f32.xlu0 %v407
    %v409 = vpop.xlane.xlu0 %408
    %v410 = vsub.f32 %v397, %v406
    %v411 = vsub.f32 %v400, %v409
    %v412 = vmul.f32 %v410, 1.442695
    %v413 = vpow.pop %v412
    %v414 = vmul.f32 %v411, 1.442695
    %v415 = vpow.pop %v414
    %v416 = vsel %vm403, %v413, 0.0
    %417 = vadd.xlane.f32.xlu0 %v416
    %v418 = vpop.xlane.xlu0 %417
    %v419 = vsel %vm403, %v415, 0.0
    %420 = vadd.xlane.f32.xlu0 %v419
    %v421 = vpop.xlane.xlu0 %420
    %v422 = vrcp.pop %v418
    %v423 = vrcp.pop %v421
    %v424 = vmul.f32 %v413, %v422
    %v425 = vmul.f32 %v415, %v423
    %v426 = vpack.c.bf16 %v425, %v424
    %v428 = vsel %vm403, %v426, 0
    %430 = vmatprep.subr.bf16.mxu0 0
    %431 = vmatpush1.bf16.msra.mxu0 %v354
    %432 = vmatprep.subr.bf16.mxu0 0
    %433 = vmatpush1.bf16.msra.mxu0 0
    %434 = vmatprep.subr.bf16.mxu0 0
    %435 = vmatpush1.bf16.msra.mxu0 0
    %436 = vmatprep.subr.bf16.mxu0 0
    %437 = vmatpush1.bf16.msra.mxu0 0
    %438 = vmatprep.subr.bf16.mxu0 0
    %439 = vmatpush1.bf16.msra.mxu0 0
    %440 = vmatprep.subr.bf16.mxu0 0
    %441 = vmatpush1.bf16.msra.mxu0 0
    %442 = vmatprep.subr.bf16.mxu0 0
    %443 = vmatpush1.bf16.msra.mxu0 0
    %444 = vmatprep.subr.bf16.mxu0 0
    %445 = vmatpush1.bf16.msra.mxu0 0
    %446 = vmatprep.subr.bf16.mxu0 0
    %447 = vmatpush1.bf16.msra.mxu0 0
    %448 = vmatprep.subr.bf16.mxu0 0
    %449 = vmatpush1.bf16.msra.mxu0 0
    %450 = vmatprep.subr.bf16.mxu0 0
    %451 = vmatpush1.bf16.msra.mxu0 0
    %452 = vmatprep.subr.bf16.mxu0 0
    %453 = vmatpush1.bf16.msra.mxu0 0
    %454 = vmatprep.subr.bf16.mxu0 0
    %455 = vmatpush1.bf16.msra.mxu0 0
    %456 = vmatprep.subr.bf16.mxu0 0
    %457 = vmatpush1.bf16.msra.mxu0 0
    %458 = vmatprep.subr.bf16.mxu0 0
    %459 = vmatpush1.bf16.msra.mxu0 0
    %460 = vmatprep.subr.bf16.mxu0 0
    %461 = vmatpush1.bf16.msra.mxu0 0
    %462 = vmatprep.mubr.bf16.mxu0 0
    %463 = vmatmul.mubr.bf16.gmra.mrb[0].mxu0 %v428
    %v464 = vpop.f32.mrb[0].mxu0
    %v465 = vadd.f32 0.0, %v464
    %v466 = vpop.f32.mrb[0].mxu0
    %v467 = vpop.f32.mrb[0].mxu0
    %v468 = vadd.f32 0.0, %v467
    %v469 = vpop.f32.mrb[0].mxu0
    %470 = vdwg.mxu0
    %472 = vrot.lane.b32.xlu0 %v352, 120
    %v473 = vpop.permute.xlu0 %472
    %475 = vrot.lane.b32.xlu0 %v353, 120
    %v476 = vpop.permute.xlu0 %475
    %v478 = vsel %vm355, %v473, 0
    %v481 = vsel %vm355, %v476, 0
    %483 = vmatprep.subr.bf16.mxu0 0
    %484 = vmatpush1.bf16.xpose.msra.mxu0 %v481
    %485 = vmatprep.subr.bf16.mxu0 0
    %486 = vmatpush1.bf16.xpose.msra.mxu0 0
    %487 = vmatprep.subr.bf16.mxu0 0
    %488 = vmatpush1.bf16.xpose.msra.mxu0 0
    %489 = vmatprep.subr.bf16.mxu0 0
    %490 = vmatpush1.bf16.xpose.msra.mxu0 0
    %491 = vmatprep.subr.bf16.mxu0 0
    %492 = vmatpush1.bf16.xpose.msra.mxu0 0
    %493 = vmatprep.subr.bf16.mxu0 0
    %494 = vmatpush1.bf16.xpose.msra.mxu0 0
    %495 = vmatprep.subr.bf16.mxu0 0
    %496 = vmatpush1.bf16.xpose.msra.mxu0 0
    %497 = vmatprep.subr.bf16.mxu0 0
    %498 = vmatpush1.bf16.xpose.msra.mxu0 0
    %499 = vmatprep.subr.bf16.mxu0 0
    %500 = vmatpush1.bf16.xpose.msra.mxu0 0
    %501 = vmatprep.subr.bf16.mxu0 0
    %502 = vmatpush1.bf16.xpose.msra.mxu0 0
    %503 = vmatprep.subr.bf16.mxu0 0
    %504 = vmatpush1.bf16.xpose.msra.mxu0 0
    %505 = vmatprep.subr.bf16.mxu0 0
    %506 = vmatpush1.bf16.xpose.msra.mxu0 0
    %507 = vmatprep.subr.bf16.mxu0 0
    %508 = vmatpush1.bf16.xpose.msra.mxu0 0
    %509 = vmatprep.subr.bf16.mxu0 0
    %510 = vmatpush1.bf16.xpose.msra.mxu0 0
    %511 = vmatprep.subr.bf16.mxu0 0
    %512 = vmatpush1.bf16.xpose.msra.mxu0 0
    %513 = vmatprep.subr.bf16.mxu0 0
    %514 = vmatpush1.bf16.xpose.msra.mxu0 0
    %515 = vmatprep.mubr.bf16.mxu0 0
    %516 = vmatmul.mubr.bf16.gmra.mrb[0].mxu0 %v478
    %v517 = vpop.f32.mrb[0].mxu0
    %v518 = vadd.f32 %v350, %v517
    %v519 = vpop.f32.mrb[0].mxu0
    %v520 = vpop.f32.mrb[0].mxu0
    %v521 = vadd.f32 %v351, %v520
    %v522 = vpop.f32.mrb[0].mxu0
    %523 = vdwg.mxu0
    %v524 = vsel %vm403, %v518, -inf
    %525 = vmax.xlane.f32.xlu0 %v524
    %v526 = vpop.xlane.xlu0 %525
    %v527 = vsel %vm403, %v521, -inf
    %528 = vmax.xlane.f32.xlu0 %v527
    %v529 = vpop.xlane.xlu0 %528
    %v530 = vsub.f32 %v518, %v526
    %v531 = vsub.f32 %v521, %v529
    %v532 = vmul.f32 %v530, 1.442695
    %v533 = vpow.pop %v532
    %v534 = vmul.f32 %v531, 1.442695
    %v535 = vpow.pop %v534
    %v536 = vsel %vm403, %v533, 0.0
    %537 = vadd.xlane.f32.xlu0 %v536
    %v538 = vpop.xlane.xlu0 %537
    %v539 = vsel %vm403, %v535, 0.0
    %540 = vadd.xlane.f32.xlu0 %v539
    %v541 = vpop.xlane.xlu0 %540
    %v542 = vrcp.pop %v538
    %v543 = vrcp.pop %v541
    %v544 = vmul.f32 %v533, %v542
    %v545 = vmul.f32 %v535, %v543
    %v546 = vpack.c.bf16 %v545, %v544
    %548 = vrot.lane.b32.xlu0 %v354, 120
    %v549 = vpop.permute.xlu0 %548
    %v552 = vsel %vm403, %v546, 0
    %554 = vmatprep.subr.bf16.mxu0 0
    %555 = vmatpush1.bf16.msra.mxu0 %v549
    %556 = vmatprep.subr.bf16.mxu0 0
    %557 = vmatpush1.bf16.msra.mxu0 0
    %558 = vmatprep.subr.bf16.mxu0 0
    %559 = vmatpush1.bf16.msra.mxu0 0
    %560 = vmatprep.subr.bf16.mxu0 0
    %561 = vmatpush1.bf16.msra.mxu0 0
    %562 = vmatprep.subr.bf16.mxu0 0
    %563 = vmatpush1.bf16.msra.mxu0 0
    %564 = vmatprep.subr.bf16.mxu0 0
    %565 = vmatpush1.bf16.msra.mxu0 0
    %566 = vmatprep.subr.bf16.mxu0 0
    %567 = vmatpush1.bf16.msra.mxu0 0
    %568 = vmatprep.subr.bf16.mxu0 0
    %569 = vmatpush1.bf16.msra.mxu0 0
    %570 = vmatprep.subr.bf16.mxu0 0
    %571 = vmatpush1.bf16.msra.mxu0 0
    %572 = vmatprep.subr.bf16.mxu0 0
    %573 = vmatpush1.bf16.msra.mxu0 0
    %574 = vmatprep.subr.bf16.mxu0 0
    %575 = vmatpush1.bf16.msra.mxu0 0
    %576 = vmatprep.subr.bf16.mxu0 0
    %577 = vmatpush1.bf16.msra.mxu0 0
    %578 = vmatprep.subr.bf16.mxu0 0
    %579 = vmatpush1.bf16.msra.mxu0 0
    %580 = vmatprep.subr.bf16.mxu0 0
    %581 = vmatpush1.bf16.msra.mxu0 0
    %582 = vmatprep.subr.bf16.mxu0 0
    %583 = vmatpush1.bf16.msra.mxu0 0
    %584 = vmatprep.subr.bf16.mxu0 0
    %585 = vmatpush1.bf16.msra.mxu0 0
    %586 = vmatprep.mubr.bf16.mxu0 0
    %587 = vmatmul.mubr.bf16.gmra.mrb[0].mxu0 %v552
    %v588 = vpop.f32.mrb[0].mxu0
    %v589 = vadd.f32 0.0, %v588
    %v590 = vpop.f32.mrb[0].mxu0
    %v591 = vpop.f32.mrb[0].mxu0
    %v592 = vadd.f32 0.0, %v591
    %v593 = vpop.f32.mrb[0].mxu0
    %594 = vdwg.mxu0
    %595 = vrot.lane.b32.xlu0 %v352, 112
    %v596 = vpop.permute.xlu0 %595
    %597 = vrot.lane.b32.xlu0 %v353, 112
    %v598 = vpop.permute.xlu0 %597
    %v600 = vsel %vm355, %v596, 0
    %v603 = vsel %vm355, %v598, 0
    %605 = vmatprep.subr.bf16.mxu0 0
    %606 = vmatpush1.bf16.xpose.msra.mxu0 %v603
    %607 = vmatprep.subr.bf16.mxu0 0
    %608 = vmatpush1.bf16.xpose.msra.mxu0 0
    %609 = vmatprep.subr.bf16.mxu0 0
    %610 = vmatpush1.bf16.xpose.msra.mxu0 0
    %611 = vmatprep.subr.bf16.mxu0 0
    %612 = vmatpush1.bf16.xpose.msra.mxu0 0
    %613 = vmatprep.subr.bf16.mxu0 0
    %614 = vmatpush1.bf16.xpose.msra.mxu0 0
    %615 = vmatprep.subr.bf16.mxu0 0
    %616 = vmatpush1.bf16.xpose.msra.mxu0 0
    %617 = vmatprep.subr.bf16.mxu0 0
    %618 = vmatpush1.bf16.xpose.msra.mxu0 0
    %619 = vmatprep.subr.bf16.mxu0 0
    %620 = vmatpush1.bf16.xpose.msra.mxu0 0
    %621 = vmatprep.subr.bf16.mxu0 0
    %622 = vmatpush1.bf16.xpose.msra.mxu0 0
    %623 = vmatprep.subr.bf16.mxu0 0
    %624 = vmatpush1.bf16.xpose.msra.mxu0 0
    %625 = vmatprep.subr.bf16.mxu0 0
    %626 = vmatpush1.bf16.xpose.msra.mxu0 0
    %627 = vmatprep.subr.bf16.mxu0 0
    %628 = vmatpush1.bf16.xpose.msra.mxu0 0
    %629 = vmatprep.subr.bf16.mxu0 0
    %630 = vmatpush1.bf16.xpose.msra.mxu0 0
    %631 = vmatprep.subr.bf16.mxu0 0
    %632 = vmatpush1.bf16.xpose.msra.mxu0 0
    %633 = vmatprep.subr.bf16.mxu0 0
    %634 = vmatpush1.bf16.xpose.msra.mxu0 0
    %635 = vmatprep.subr.bf16.mxu0 0
    %636 = vmatpush1.bf16.xpose.msra.mxu0 0
    %637 = vmatprep.mubr.bf16.mxu0 0
    %638 = vmatmul.mubr.bf16.gmra.mrb[0].mxu0 %v600
    %v639 = vpop.f32.mrb[0].mxu0
    %v640 = vadd.f32 %v350, %v639
    %v641 = vpop.f32.mrb[0].mxu0
    %v642 = vpop.f32.mrb[0].mxu0
    %v643 = vadd.f32 %v351, %v642
    %v644 = vpop.f32.mrb[0].mxu0
    %645 = vdwg.mxu0
    %v646 = vsel %vm403, %v640, -inf
    %647 = vmax.xlane.f32.xlu0 %v646
    %v648 = vpop.xlane.xlu0 %647
    %v649 = vsel %vm403, %v643, -inf
    %650 = vmax.xlane.f32.xlu0 %v649
    %v651 = vpop.xlane.xlu0 %650
    %v652 = vsub.f32 %v640, %v648
    %v653 = vsub.f32 %v643, %v651
    %v654 = vmul.f32 %v652, 1.442695
    %v655 = vpow.pop %v654
    %v656 = vmul.f32 %v653, 1.442695
    %v657 = vpow.pop %v656
    %v658 = vsel %vm403, %v655, 0.0
    %659 = vadd.xlane.f32.xlu0 %v658
    %v660 = vpop.xlane.xlu0 %659
    %v661 = vsel %vm403, %v657, 0.0
    %662 = vadd.xlane.f32.xlu0 %v661
    %v663 = vpop.xlane.xlu0 %662
    %v664 = vrcp.pop %v660
    %v665 = vrcp.pop %v663
    %v666 = vmul.f32 %v655, %v664
    %v667 = vmul.f32 %v657, %v665
    %v668 = vpack.c.bf16 %v667, %v666
    %669 = vrot.lane.b32.xlu0 %v354, 112
    %v670 = vpop.permute.xlu0 %669
    %v673 = vsel %vm403, %v668, 0
    %675 = vmatprep.subr.bf16.mxu0 0
    %676 = vmatpush1.bf16.msra.mxu0 %v670
    %677 = vmatprep.subr.bf16.mxu0 0
    %678 = vmatpush1.bf16.msra.mxu0 0
    %679 = vmatprep.subr.bf16.mxu0 0
    %680 = vmatpush1.bf16.msra.mxu0 0
    %681 = vmatprep.subr.bf16.mxu0 0
    %682 = vmatpush1.bf16.msra.mxu0 0
    %683 = vmatprep.subr.bf16.mxu0 0
    %684 = vmatpush1.bf16.msra.mxu0 0
    %685 = vmatprep.subr.bf16.mxu0 0
    %686 = vmatpush1.bf16.msra.mxu0 0
    %687 = vmatprep.subr.bf16.mxu0 0
    %688 = vmatpush1.bf16.msra.mxu0 0
    %689 = vmatprep.subr.bf16.mxu0 0
    %690 = vmatpush1.bf16.msra.mxu0 0
    %691 = vmatprep.subr.bf16.mxu0 0
    %692 = vmatpush1.bf16.msra.mxu0 0
    %693 = vmatprep.subr.bf16.mxu0 0
    %694 = vmatpush1.bf16.msra.mxu0 0
    %695 = vmatprep.subr.bf16.mxu0 0
    %696 = vmatpush1.bf16.msra.mxu0 0
    %697 = vmatprep.subr.bf16.mxu0 0
    %698 = vmatpush1.bf16.msra.mxu0 0
    %699 = vmatprep.subr.bf16.mxu0 0
    %700 = vmatpush1.bf16.msra.mxu0 0
    %701 = vmatprep.subr.bf16.mxu0 0
    %702 = vmatpush1.bf16.msra.mxu0 0
    %703 = vmatprep.subr.bf16.mxu0 0
    %704 = vmatpush1.bf16.msra.mxu0 0
    %705 = vmatprep.subr.bf16.mxu0 0
    %706 = vmatpush1.bf16.msra.mxu0 0
    %707 = vmatprep.mubr.bf16.mxu0 0
    %708 = vmatmul.mubr.bf16.gmra.mrb[0].mxu0 %v673
    %v709 = vpop.f32.mrb[0].mxu0
    %v710 = vadd.f32 0.0, %v709
    %v711 = vpop.f32.mrb[0].mxu0
    %v712 = vpop.f32.mrb[0].mxu0
    %v713 = vadd.f32 0.0, %v712
    %v714 = vpop.f32.mrb[0].mxu0
    %715 = vdwg.mxu0
    %716 = vrot.lane.b32.xlu0 %v352, 104
    %v717 = vpop.permute.xlu0 %716
    %718 = vrot.lane.b32.xlu0 %v353, 104
    %v719 = vpop.permute.xlu0 %718
    %v721 = vsel %vm355, %v717, 0
    %v724 = vsel %vm355, %v719, 0
    %726 = vmatprep.subr.bf16.mxu0 0
    %727 = vmatpush1.bf16.xpose.msra.mxu0 %v724
    %728 = vmatprep.subr.bf16.mxu0 0
    %729 = vmatpush1.bf16.xpose.msra.mxu0 0
    %730 = vmatprep.subr.bf16.mxu0 0
    %731 = vmatpush1.bf16.xpose.msra.mxu0 0
    %732 = vmatprep.subr.bf16.mxu0 0
    %733 = vmatpush1.bf16.xpose.msra.mxu0 0
    %734 = vmatprep.subr.bf16.mxu0 0
    %735 = vmatpush1.bf16.xpose.msra.mxu0 0
    %736 = vmatprep.subr.bf16.mxu0 0
    %737 = vmatpush1.bf16.xpose.msra.mxu0 0
    %738 = vmatprep.subr.bf16.mxu0 0
    %739 = vmatpush1.bf16.xpose.msra.mxu0 0
    %740 = vmatprep.subr.bf16.mxu0 0
    %741 = vmatpush1.bf16.xpose.msra.mxu0 0
    %742 = vmatprep.subr.bf16.mxu0 0
    %743 = vmatpush1.bf16.xpose.msra.mxu0 0
    %744 = vmatprep.subr.bf16.mxu0 0
    %745 = vmatpush1.bf16.xpose.msra.mxu0 0
    %746 = vmatprep.subr.bf16.mxu0 0
    %747 = vmatpush1.bf16.xpose.msra.mxu0 0
    %748 = vmatprep.subr.bf16.mxu0 0
    %749 = vmatpush1.bf16.xpose.msra.mxu0 0
    %750 = vmatprep.subr.bf16.mxu0 0
    %751 = vmatpush1.bf16.xpose.msra.mxu0 0
    %752 = vmatprep.subr.bf16.mxu0 0
    %753 = vmatpush1.bf16.xpose.msra.mxu0 0
    %754 = vmatprep.subr.bf16.mxu0 0
    %755 = vmatpush1.bf16.xpose.msra.mxu0 0
    %756 = vmatprep.subr.bf16.mxu0 0
    %757 = vmatpush1.bf16.xpose.msra.mxu0 0
    %758 = vmatprep.mubr.bf16.mxu0 0
    %759 = vmatmul.mubr.bf16.gmra.mrb[0].mxu0 %v721
    %v760 = vpop.f32.mrb[0].mxu0
    %v761 = vadd.f32 %v350, %v760
    %v762 = vpop.f32.mrb[0].mxu0
    %v763 = vpop.f32.mrb[0].mxu0
    %v764 = vadd.f32 %v351, %v763
    %v765 = vpop.f32.mrb[0].mxu0
    %766 = vdwg.mxu0
    %v767 = vsel %vm403, %v761, -inf
    %768 = vmax.xlane.f32.xlu0 %v767
    %v769 = vpop.xlane.xlu0 %768
    %v770 = vsel %vm403, %v764, -inf
    %771 = vmax.xlane.f32.xlu0 %v770
    %v772 = vpop.xlane.xlu0 %771
    %v773 = vsub.f32 %v761, %v769
    %v774 = vsub.f32 %v764, %v772
    %v775 = vmul.f32 %v773, 1.442695
    %v776 = vpow.pop %v775
    %v777 = vmul.f32 %v774, 1.442695
    %v778 = vpow.pop %v777
    %v779 = vsel %vm403, %v776, 0.0
    %780 = vadd.xlane.f32.xlu0 %v779
    %v781 = vpop.xlane.xlu0 %780
    %v782 = vsel %vm403, %v778, 0.0
    %783 = vadd.xlane.f32.xlu0 %v782
    %v784 = vpop.xlane.xlu0 %783
    %v785 = vrcp.pop %v781
    %v786 = vrcp.pop %v784
    %v787 = vmul.f32 %v776, %v785
    %v788 = vmul.f32 %v778, %v786
    %v789 = vpack.c.bf16 %v788, %v787
    %790 = vrot.lane.b32.xlu0 %v354, 104
    %v791 = vpop.permute.xlu0 %790
    %v794 = vsel %vm403, %v789, 0
    %796 = vmatprep.subr.bf16.mxu0 0
    %797 = vmatpush1.bf16.msra.mxu0 %v791
    %798 = vmatprep.subr.bf16.mxu0 0
    %799 = vmatpush1.bf16.msra.mxu0 0
    %800 = vmatprep.subr.bf16.mxu0 0
    %801 = vmatpush1.bf16.msra.mxu0 0
    %802 = vmatprep.subr.bf16.mxu0 0
    %803 = vmatpush1.bf16.msra.mxu0 0
    %804 = vmatprep.subr.bf16.mxu0 0
    %805 = vmatpush1.bf16.msra.mxu0 0
    %806 = vmatprep.subr.bf16.mxu0 0
    %807 = vmatpush1.bf16.msra.mxu0 0
    %808 = vmatprep.subr.bf16.mxu0 0
    %809 = vmatpush1.bf16.msra.mxu0 0
    %810 = vmatprep.subr.bf16.mxu0 0
    %811 = vmatpush1.bf16.msra.mxu0 0
    %812 = vmatprep.subr.bf16.mxu0 0
    %813 = vmatpush1.bf16.msra.mxu0 0
    %814 = vmatprep.subr.bf16.mxu0 0
    %815 = vmatpush1.bf16.msra.mxu0 0
    %816 = vmatprep.subr.bf16.mxu0 0
    %817 = vmatpush1.bf16.msra.mxu0 0
    %818 = vmatprep.subr.bf16.mxu0 0
    %819 = vmatpush1.bf16.msra.mxu0 0
    %820 = vmatprep.subr.bf16.mxu0 0
    %821 = vmatpush1.bf16.msra.mxu0 0
    %822 = vmatprep.subr.bf16.mxu0 0
    %823 = vmatpush1.bf16.msra.mxu0 0
    %824 = vmatprep.subr.bf16.mxu0 0
    %825 = vmatpush1.bf16.msra.mxu0 0
    %826 = vmatprep.subr.bf16.mxu0 0
    %827 = vmatpush1.bf16.msra.mxu0 0
    %828 = vmatprep.mubr.bf16.mxu0 0
    %829 = vmatmul.mubr.bf16.gmra.mrb[0].mxu0 %v794
    %v830 = vpop.f32.mrb[0].mxu0
    %v831 = vadd.f32 0.0, %v830
    %v832 = vpop.f32.mrb[0].mxu0
    %v833 = vpop.f32.mrb[0].mxu0
    %v834 = vadd.f32 0.0, %v833
    %v835 = vpop.f32.mrb[0].mxu0
    %836 = vdwg.mxu0
    %839 = vrot.lane.b32.xlu0 %v589, 8
    %v840 = vpop.permute.xlu0 %839
    %841 = vrot.lane.b32.xlu0 %v592, 8
    %v842 = vpop.permute.xlu0 %841
    %847 = vrot.lane.b32.xlu0 %v710, 16
    %v848 = vpop.permute.xlu0 %847
    %849 = vrot.lane.b32.xlu0 %v713, 16
    %v850 = vpop.permute.xlu0 %849
    %855 = vrot.lane.b32.xlu0 %v831, 24
    %v856 = vpop.permute.xlu0 %855
    %857 = vrot.lane.b32.xlu0 %v834, 24
    %v858 = vpop.permute.xlu0 %857
    %v861 = vsel %vm355, %v465, %v840
    %v862 = vsel %vm355, %v468, %v842
    %v863 = vsel %vm403, %v861, %v848
    %v864 = vsel %vm403, %v862, %v850
    %vm865 = vcmask 195584
    %v866 = vsel %vm865, %v863, %v856
    %v867 = vsel %vm865, %v864, %v858
    %v868 = vpack.c.bf16 %v867, %v866
    %v869 = vld [vmem:[%s9] sm:$0xf]
    %v870 = vld [vmem:[%s9 + $0x4] sm:$0xf]
    %v871 = vld [vmem:[%s9 + $0x8] sm:$0xf]
    %v872 = vld [vmem:[%s9 + $0xc] sm:$0xf]
    %v873 = vld [vmem:[%s10] sm:$0x1]
    %v875 = vlaneseq
    %v876 = vshrl.u32 %v875, 7
    %v877 = vsub.s32 0, %v876
    %v878 = vrot.slane %v873, %v877
    %v884 = vunpack.c.l.b16 %v869
    %v885 = vunpack.c.l.b16 %v870
    %v886 = vunpack.c.l.b16 %v871
    %v887 = vunpack.c.l.b16 %v872
    %v888 = vpack.c.b16 %v885, %v884
    %v889 = vpack.c.b16 %v887, %v886
    %v893 = vsel %vm152, %v868, 0
    %895 = vmatprep.subr.bf16.mxu0 0
    %896 = vmatpush1.bf16.msra.mxu0 %v888
    %897 = vmatprep.subr.bf16.mxu0 0
    %898 = vmatpush1.bf16.msra.mxu0 %v889
    %899 = vmatprep.subr.bf16.mxu0 0
    %900 = vmatpush1.bf16.msra.mxu0 0
    %901 = vmatprep.subr.bf16.mxu0 0
    %902 = vmatpush1.bf16.msra.mxu0 0
    %903 = vmatprep.subr.bf16.mxu0 0
    %904 = vmatpush1.bf16.msra.mxu0 0
    %905 = vmatprep.subr.bf16.mxu0 0
    %906 = vmatpush1.bf16.msra.mxu0 0
    %907 = vmatprep.subr.bf16.mxu0 0
    %908 = vmatpush1.bf16.msra.mxu0 0
    %909 = vmatprep.subr.bf16.mxu0 0
    %910 = vmatpush1.bf16.msra.mxu0 0
    %911 = vmatprep.subr.bf16.mxu0 0
    %912 = vmatpush1.bf16.msra.mxu0 0
    %913 = vmatprep.subr.bf16.mxu0 0
    %914 = vmatpush1.bf16.msra.mxu0 0
    %915 = vmatprep.subr.bf16.mxu0 0
    %916 = vmatpush1.bf16.msra.mxu0 0
    %917 = vmatprep.subr.bf16.mxu0 0
    %918 = vmatpush1.bf16.msra.mxu0 0
    %919 = vmatprep.subr.bf16.mxu0 0
    %920 = vmatpush1.bf16.msra.mxu0 0
    %921 = vmatprep.subr.bf16.mxu0 0
    %922 = vmatpush1.bf16.msra.mxu0 0
    %923 = vmatprep.subr.bf16.mxu0 0
    %924 = vmatpush1.bf16.msra.mxu0 0
    %925 = vmatprep.subr.bf16.mxu0 0
    %926 = vmatpush1.bf16.msra.mxu0 0
    %927 = vmatprep.mubr.bf16.mxu0 0
    %928 = vmatmul.mubr.bf16.gmra.mrb[0].mxu0 %v893
    %v929 = vpop.f32.mrb[0].mxu0
    %v930 = vadd.f32 %v878, %v929
    %v931 = vpop.f32.mrb[0].mxu0
    %v932 = vpop.f32.mrb[0].mxu0
    %v933 = vadd.f32 %v878, %v932
    %v934 = vpop.f32.mrb[0].mxu0
    %935 = vdwg.mxu0
    %936 = vst.msk [vmem:[#allocation13] sm:$0xff] %vm152, %v930
    %937 = vst.msk [vmem:[#allocation13 + $0x8] sm:$0xff] %vm152, %v933
    // Predicated region
    $region70: #{tpu_custom_call.1} parent=1 // pred_check
      _
    $region71: #{tpu_custom_call.1} parent=1 // pred_check_branch
      %939 = sbr.rel (0) target = $region73
    $region72: #{tpu_custom_call.1} parent=1 // pred_region
      %s941 = ssub.s32 256, 256
      %942 = vsyncadd [#allocation4], %s941
      %s943 = sshll.u32 [#allocation13], 4
      %s944 = int_to_ptr.vmem [resolvable:$true] %s943
      %949 = dma.vmem_to_hbm [thread:$0]  %s944, 256, %s11, [#allocation4], 128, 128, 8
    $region73: #{tpu_custom_call.1} parent=1 // pred_fallthru
      _
    // Predicated region
    $region74: #{tpu_custom_call.1} parent=1 // pred_check
      _
    $region75: #{tpu_custom_call.1} parent=1 // pred_check_branch
      %951 = sbr.rel (0) target = $region77
    $region76: #{tpu_custom_call.1} parent=1 // pred_region
      %952 = dma.done [#allocation4], 256
    $region77: #{tpu_custom_call.1} parent=1 // pred_fallthru
      _
    %953 = vsyncpa [#allocation3], 1
    %954 = vsyncpa [#allocation6], 1
    %955 = vsyncpa [#allocation9], 1
    %956 = vsyncpa [#allocation12], 1
    %957 = vsyncpa [#allocation4], 1

</llo_original>
